<compile_context>
chip_gen: v6e
topology: v6e:2x2x1
jax: 0.10.0
libtpu: 0.0.40
codegen_flags: <defaults>
</compile_context>

<pallas_src>
import functools
import math

import jax
import jax.numpy as jnp
from jax.experimental import pallas as pl
from jax.experimental.pallas import tpu as pltpu

MIN_LOG_STD = -20.0
MAX_LOG_STD = 2.0
HALF_LOG_2PI = 0.5 * math.log(2.0 * math.pi)
LOG_2 = math.log(2.0)


def actor_kernel(n_actions, use_bf16,
                 state_ref, w1_ref, b1_ref, w2_ref, b2_ref,
                 wht_ref, bht_ref, epst_ref, out_ref):
    dot_dtype = jnp.bfloat16 if use_bf16 else jnp.float32
    x = state_ref[...].astype(dot_dtype)                       # [TB, n_states]

    # feature MLP: Linear -> ReLU -> Linear -> ReLU  (f32 accumulation on MXU)
    h1 = jnp.dot(x, w1_ref[...], preferred_element_type=jnp.float32) + b1_ref[...]
    h1 = jnp.maximum(h1, 0.0)                                  # [TB, 128] f32
    h2 = jnp.dot(h1.astype(dot_dtype), w2_ref[...],
                 preferred_element_type=jnp.float32) + b2_ref[...]
    h2 = jnp.maximum(h2, 0.0)                                  # [TB, 128] f32

    # Fused avg/log_std head, produced directly transposed ([2A, TB]) via an
    # NT dot_general (contract last dims) -> batch maps to lanes for ALL the
    # downstream elementwise / transcendental work (lane-dense VPU/EUP).
    head_t = jax.lax.dot_general(
        wht_ref[...], h2.astype(dot_dtype),
        dimension_numbers=(((1,), (1,)), ((), ())),
        preferred_element_type=jnp.float32)                    # [2A, TB]
    head_t = jnp.tanh(head_t + bht_ref[...])                   # one fused tanh

    avg = head_t[:n_actions, :]                                # sublane slice (free)
    log_std = head_t[n_actions:, :]
    log_std = MIN_LOG_STD + 0.5 * (MAX_LOG_STD - MIN_LOG_STD) * (log_std + 1.0)
    std = jnp.exp(log_std)

    # reparameterized sample: z = mu + std * eps,  eps ~ N(0, 1)
    eps = epst_ref[...]                                        # [A, TB]
    z = avg + std * eps
    action = jnp.tanh(z)

    # Normal(avg, std).log_prob(z): (z - avg) == std * eps exactly, so the
    # quadratic term is -0.5 * eps^2 (no divide, no near-denormal std^2).
    normal_lp = -0.5 * eps * eps - log_std - HALF_LOG_2PI

    # log(1 - tanh(z)^2) via the stable identity 2*(log 2 - z - softplus(-2z)).
    neg2z = -2.0 * z
    softplus_neg2z = jnp.maximum(neg2z, 0.0) + jnp.log1p(jnp.exp(-jnp.abs(neg2z)))
    tanh_corr = 2.0 * (LOG_2 - z - softplus_neg2z)

    log_prob = normal_lp - tanh_corr
    logp_sum = jnp.sum(log_prob, axis=0, keepdims=True)        # [1, TB] sublane adds

    # Lane-dense output slab [A+1, TB]: two sublane writes, no lane concat.
    out_ref[:n_actions, :] = action.astype(out_ref.dtype)
    out_ref[n_actions:, :] = logp_sum.astype(out_ref.dtype)


def actor_forward(state, params, eps, *, block_b=4096, use_bf16=None):
    """state: [B, n_states] f32; eps: [B, n_actions] f32 standard-normal noise.
    Returns (action [B, n_actions], log_prob [B, 1])."""
    B, n_states = state.shape
    n_actions = eps.shape[1]
    hidden = params["w1"].shape[1]

    # ---- batch tiling ----------------------------------------------------
    # Lane-dense transposed output => batch tile tb must be a multiple of 128.
    # Large tiles amortize per-step overhead; >=2 grid steps (when the batch is
    # big enough) lets dimension_semantics=("parallel",) use both v7x TCs.
    def cdiv(a, b):
        return (a + b - 1) // b

    tb_max = max(128, (block_b // 128) * 128)
    b128 = cdiv(B, 128) * 128
    n_steps = cdiv(b128, tb_max)
    if b128 >= 256:
        n_steps = max(n_steps, 2)
    tb = cdiv(cdiv(b128, n_steps), 128) * 128
    B_pad = n_steps * tb

    if use_bf16 is None:
        # bf16 operands only pay off once the [tb,128]x[128,128] matmul
        # dominates; at small tb the full-width .astype casts cancel the gain.
        use_bf16 = tb >= 1024

    if B_pad != B:
        pad = B_pad - B
        state = jnp.pad(state, ((0, pad), (0, 0)))
        eps = jnp.pad(eps, ((0, pad), (0, 0)))
    eps_t = eps.T                                               # [A, B_pad] lane-dense

    # Fuse the two heads; pass weight transposed [2A, hidden], bias [2A, 1].
    w1, b1, w2, b2 = params["w1"], params["b1"], params["w2"], params["b2"]
    wh_t = jnp.concatenate([params["w_avg"], params["w_log_std"]], axis=1).T
    bh_t = jnp.concatenate([params["b_avg"], params["b_log_std"]], axis=1).T
    if use_bf16:
        w1 = w1.astype(jnp.bfloat16)
        w2 = w2.astype(jnp.bfloat16)
        wh_t = wh_t.astype(jnp.bfloat16)

    kernel = functools.partial(actor_kernel, n_actions, use_bf16)
    resident = lambda i: (0, 0)   # weights/biases pinned in VMEM across steps

    out = pl.pallas_call(
        kernel,
        out_shape=jax.ShapeDtypeStruct((n_actions + 1, B_pad), jnp.float32),
        grid=(B_pad // tb,),
        in_specs=[
            pl.BlockSpec((tb, n_states), lambda i: (i, 0)),         # state rows
            pl.BlockSpec((n_states, hidden), resident),             # w1
            pl.BlockSpec((1, hidden), resident),                    # b1
            pl.BlockSpec((hidden, hidden), resident),               # w2
            pl.BlockSpec((1, hidden), resident),                    # b2
            pl.BlockSpec((2 * n_actions, hidden), resident),        # w_head^T
            pl.BlockSpec((2 * n_actions, 1), resident),             # b_head^T
            pl.BlockSpec((n_actions, tb), lambda i: (0, i)),        # eps^T (lane-dense)
        ],
        out_specs=pl.BlockSpec((n_actions + 1, tb), lambda i: (0, i)),
        compiler_params=pltpu.CompilerParams(
            dimension_semantics=("parallel",)),
    )(state, w1, b1, w2, b2, wh_t, bh_t, eps_t)

    action = out[:n_actions, :B].T                               # [B, n_actions]
    log_prob = out[n_actions:, :B].T                             # [B, 1]
    return action, log_prob


def actor_reference(state, params, eps):
    """Pure-JAX reference matching the PyTorch Actor.forward semantics."""
    h1 = jnp.maximum(state @ params["w1"] + params["b1"], 0.0)
    h2 = jnp.maximum(h1 @ params["w2"] + params["b2"], 0.0)
    avg = jnp.tanh(h2 @ params["w_avg"] + params["b_avg"])
    log_std = jnp.tanh(h2 @ params["w_log_std"] + params["b_log_std"])
    log_std = MIN_LOG_STD + 0.5 * (MAX_LOG_STD - MIN_LOG_STD) * (log_std + 1.0)
    std = jnp.exp(log_std)
    z = avg + std * eps
    action = jnp.tanh(z)
    normal_lp = -0.5 * eps * eps - log_std - HALF_LOG_2PI
    log_prob = normal_lp - jnp.log(1.0 - action * action + 1e-7)
    return action, jnp.sum(log_prob, axis=-1, keepdims=True)


def init_params(key, n_states, n_actions, hidden=128):
    """PyTorch-Linear-style init (uniform +/- 1/sqrt(fan_in)).
    Weights stored [in, out]; biases [1, out]."""
    def linear(k, fan_in, fan_out):
        kw, kb = jax.random.split(k)
        bound = 1.0 / jnp.sqrt(fan_in)
        w = jax.random.uniform(kw, (fan_in, fan_out), jnp.float32, -bound, bound)
        b = jax.random.uniform(kb, (1, fan_out), jnp.float32, -bound, bound)
        return w, b

    k1, k2, k3, k4 = jax.random.split(key, 4)
    w1, b1 = linear(k1, n_states, hidden)
    w2, b2 = linear(k2, hidden, hidden)
    w_ls, b_ls = linear(k3, hidden, n_actions)
    w_avg, b_avg = linear(k4, hidden, n_actions)
    return {
        "w1": w1, "b1": b1,
        "w2": w2, "b2": b2,
        "w_log_std": w_ls, "b_log_std": b_ls,
        "w_avg": w_avg, "b_avg": b_avg,
    }


if __name__ == "__main__":
    n_states, n_actions, batch = 16, 4, 8

    key = jax.random.PRNGKey(0)
    k_params, k_state, k_eps = jax.random.split(key, 3)

    params = init_params(k_params, n_states, n_actions)
    state = jax.random.normal(k_state, (batch, n_states), jnp.float32)
    eps = jax.random.normal(k_eps, (batch, n_actions), jnp.float32)

    action, log_prob = jax.jit(actor_forward)(state, params, eps)
    jax.block_until_ready((action, log_prob))

    ref_action, ref_log_prob = actor_reference(state, params, eps)

    assert action.shape == (batch, n_actions)
    assert log_prob.shape == (batch, 1)
    assert bool(jnp.all(jnp.abs(action) <= 1.0))
    assert bool(jnp.all(jnp.isfinite(action)))
    assert bool(jnp.all(jnp.isfinite(log_prob)))
    assert bool(jnp.allclose(action, ref_action, atol=1e-3, rtol=1e-3))
    assert bool(jnp.allclose(log_prob, ref_log_prob, atol=1e-3, rtol=1e-3))

    print("KERNEL_OK")
</pallas_src>

<mosaic_0001>
module attributes {stable_mosaic.version = 11 : i64} {
  func.func @actor_kernel(%arg0: i32, %arg1: memref<128x16xf32, #tpu.memory_space<vmem>>, %arg2: memref<16x128xf32, #tpu.memory_space<vmem>>, %arg3: memref<1x128xf32, #tpu.memory_space<vmem>>, %arg4: memref<128x128xf32, #tpu.memory_space<vmem>>, %arg5: memref<1x128xf32, #tpu.memory_space<vmem>>, %arg6: memref<8x128xf32, #tpu.memory_space<vmem>>, %arg7: memref<8x1xf32, #tpu.memory_space<vmem>>, %arg8: memref<4x128xf32, #tpu.memory_space<vmem>>, %arg9: memref<5x128xf32, #tpu.memory_space<vmem>>) attributes {dimension_semantics = [#tpu.dimension_semantics<parallel>], iteration_bounds = array<i64: 1>, scalar_prefetch = 0 : i64, scratch_operands = 0 : i64, tpu.core_type = #tpu.core_type<tc>, window_params = [{transform_indices = @transform_0, window_bounds = array<i64: 128, 16>}, {pipeline_mode = #tpu.pipeline_mode<synchronous>, transform_indices = @transform_1, window_bounds = array<i64: 16, 128>}, {pipeline_mode = #tpu.pipeline_mode<synchronous>, transform_indices = @transform_2, window_bounds = array<i64: 1, 128>}, {pipeline_mode = #tpu.pipeline_mode<synchronous>, transform_indices = @transform_3, window_bounds = array<i64: 128, 128>}, {pipeline_mode = #tpu.pipeline_mode<synchronous>, transform_indices = @transform_4, window_bounds = array<i64: 1, 128>}, {pipeline_mode = #tpu.pipeline_mode<synchronous>, transform_indices = @transform_5, window_bounds = array<i64: 8, 128>}, {pipeline_mode = #tpu.pipeline_mode<synchronous>, transform_indices = @transform_6, window_bounds = array<i64: 8, 1>}, {transform_indices = @transform_7, window_bounds = array<i64: 4, 128>}, {transform_indices = @transform_8, window_bounds = array<i64: 5, 128>}]} {
    %c0 = arith.constant 0 : index
    %c0_0 = arith.constant 0 : index
    %0 = vector.load %arg1[%c0, %c0_0] : memref<128x16xf32, #tpu.memory_space<vmem>>, vector<128x16xf32>
    %c0_1 = arith.constant 0 : index
    %c0_2 = arith.constant 0 : index
    %1 = vector.load %arg2[%c0_1, %c0_2] : memref<16x128xf32, #tpu.memory_space<vmem>>, vector<16x128xf32>
    %cst = arith.constant dense<0.000000e+00> : vector<128x128xf32>
    %2 = tpu.matmul %0, %1, %cst {dimension_numbers = #tpu.dot_dimension_numbers<[1], [0], [0], [1], [0, 0, 1, 1], [], []>} : vector<128x16xf32>, vector<16x128xf32>, vector<128x128xf32> -> vector<128x128xf32>
    %c0_3 = arith.constant 0 : index
    %c0_4 = arith.constant 0 : index
    %3 = vector.load %arg3[%c0_3, %c0_4] : memref<1x128xf32, #tpu.memory_space<vmem>>, vector<1x128xf32>
    %4 = vector.broadcast %3 : vector<1x128xf32> to vector<128x128xf32>
    %5 = arith.addf %2, %4 : vector<128x128xf32>
    %cst_5 = arith.constant 0.000000e+00 : f32
    %6 = vector.broadcast %cst_5 : f32 to vector<128x128xf32>
    %7 = arith.maximumf %5, %6 : vector<128x128xf32>
    %c0_6 = arith.constant 0 : index
    %c0_7 = arith.constant 0 : index
    %8 = vector.load %arg4[%c0_6, %c0_7] : memref<128x128xf32, #tpu.memory_space<vmem>>, vector<128x128xf32>
    %cst_8 = arith.constant dense<0.000000e+00> : vector<128x128xf32>
    %9 = tpu.matmul %7, %8, %cst_8 {dimension_numbers = #tpu.dot_dimension_numbers<[1], [0], [0], [1], [0, 0, 1, 1], [], []>} : vector<128x128xf32>, vector<128x128xf32>, vector<128x128xf32> -> vector<128x128xf32>
    %c0_9 = arith.constant 0 : index
    %c0_10 = arith.constant 0 : index
    %10 = vector.load %arg5[%c0_9, %c0_10] : memref<1x128xf32, #tpu.memory_space<vmem>>, vector<1x128xf32>
    %11 = vector.broadcast %10 : vector<1x128xf32> to vector<128x128xf32>
    %12 = arith.addf %9, %11 : vector<128x128xf32>
    %cst_11 = arith.constant 0.000000e+00 : f32
    %13 = vector.broadcast %cst_11 : f32 to vector<128x128xf32>
    %14 = arith.maximumf %12, %13 : vector<128x128xf32>
    %c0_12 = arith.constant 0 : index
    %c0_13 = arith.constant 0 : index
    %15 = vector.load %arg6[%c0_12, %c0_13] : memref<8x128xf32, #tpu.memory_space<vmem>>, vector<8x128xf32>
    %cst_14 = arith.constant dense<0.000000e+00> : vector<8x128xf32>
    %16 = tpu.matmul %15, %14, %cst_14 {dimension_numbers = #tpu.dot_dimension_numbers<[1], [1], [0], [0], [0, 0, 1, 0], [], []>} : vector<8x128xf32>, vector<128x128xf32>, vector<8x128xf32> -> vector<8x128xf32>
    %c0_15 = arith.constant 0 : index
    %c0_16 = arith.constant 0 : index
    %17 = vector.load %arg7[%c0_15, %c0_16] : memref<8x1xf32, #tpu.memory_space<vmem>>, vector<8x1xf32>
    %18 = vector.broadcast %17 : vector<8x1xf32> to vector<8x128xf32>
    %19 = arith.addf %16, %18 : vector<8x128xf32>
    %20 = math.tanh %19 : vector<8x128xf32>
    %21 = vector.extract_strided_slice %20 {offsets = [0, 0], sizes = [4, 128], strides = [1, 1]} : vector<8x128xf32> to vector<4x128xf32>
    %22 = vector.extract_strided_slice %20 {offsets = [4, 0], sizes = [4, 128], strides = [1, 1]} : vector<8x128xf32> to vector<4x128xf32>
    %cst_17 = arith.constant 1.000000e+00 : f32
    %23 = vector.broadcast %cst_17 : f32 to vector<4x128xf32>
    %24 = arith.addf %22, %23 : vector<4x128xf32>
    %cst_18 = arith.constant 1.100000e+01 : f32
    %25 = vector.broadcast %cst_18 : f32 to vector<4x128xf32>
    %26 = arith.mulf %25, %24 : vector<4x128xf32>
    %cst_19 = arith.constant -2.000000e+01 : f32
    %27 = vector.broadcast %cst_19 : f32 to vector<4x128xf32>
    %28 = arith.addf %27, %26 : vector<4x128xf32>
    %29 = math.exp %28 : vector<4x128xf32>
    %c0_20 = arith.constant 0 : index
    %c0_21 = arith.constant 0 : index
    %30 = vector.load %arg8[%c0_20, %c0_21] : memref<4x128xf32, #tpu.memory_space<vmem>>, vector<4x128xf32>
    %31 = arith.mulf %29, %30 : vector<4x128xf32>
    %32 = arith.addf %21, %31 : vector<4x128xf32>
    %33 = math.tanh %32 : vector<4x128xf32>
    %cst_22 = arith.constant -5.000000e-01 : f32
    %34 = vector.broadcast %cst_22 : f32 to vector<4x128xf32>
    %35 = arith.mulf %34, %30 : vector<4x128xf32>
    %36 = arith.mulf %35, %30 : vector<4x128xf32>
    %37 = arith.subf %36, %28 : vector<4x128xf32>
    %cst_23 = arith.constant 0.918938517 : f32
    %38 = vector.broadcast %cst_23 : f32 to vector<4x128xf32>
    %39 = arith.subf %37, %38 : vector<4x128xf32>
    %cst_24 = arith.constant -2.000000e+00 : f32
    %40 = vector.broadcast %cst_24 : f32 to vector<4x128xf32>
    %41 = arith.mulf %40, %32 : vector<4x128xf32>
    %cst_25 = arith.constant 0.000000e+00 : f32
    %42 = vector.broadcast %cst_25 : f32 to vector<4x128xf32>
    %43 = arith.maximumf %41, %42 : vector<4x128xf32>
    %44 = math.absf %41 : vector<4x128xf32>
    %cst_26 = arith.constant 0.000000e+00 : f32
    %45 = vector.broadcast %cst_26 : f32 to vector<4x128xf32>
    %46 = arith.subf %45, %44 : vector<4x128xf32>
    %47 = math.exp %46 : vector<4x128xf32>
    %48 = math.log1p %47 : vector<4x128xf32>
    %49 = arith.addf %43, %48 : vector<4x128xf32>
    %cst_27 = arith.constant 0.693147182 : f32
    %50 = vector.broadcast %cst_27 : f32 to vector<4x128xf32>
    %51 = arith.subf %50, %32 : vector<4x128xf32>
    %52 = arith.subf %51, %49 : vector<4x128xf32>
    %cst_28 = arith.constant 2.000000e+00 : f32
    %53 = vector.broadcast %cst_28 : f32 to vector<4x128xf32>
    %54 = arith.mulf %53, %52 : vector<4x128xf32>
    %55 = arith.subf %39, %54 : vector<4x128xf32>
    %cst_29 = arith.constant dense<0.000000e+00> : vector<128xf32>
    %56 = vector.multi_reduction <add>, %55, %cst_29 [0] : vector<4x128xf32> to vector<128xf32>
    %57 = vector.shape_cast %56 : vector<128xf32> to vector<1x128xf32>
    %c0_30 = arith.constant 0 : index
    %c0_31 = arith.constant 0 : index
    %58 = vector.load %arg9[%c0_30, %c0_31] : memref<5x128xf32, #tpu.memory_space<vmem>>, vector<4x128xf32>
    tpu.vector_store %arg9[%c0_30, %c0_31], %33 {strides = array<i32>} : memref<5x128xf32, #tpu.memory_space<vmem>>, vector<4x128xf32>,
    %c4 = arith.constant 4 : index
    %c0_32 = arith.constant 0 : index
    %59 = vector.load %arg9[%c4, %c0_32] : memref<5x128xf32, #tpu.memory_space<vmem>>, vector<1x128xf32>
    tpu.vector_store %arg9[%c4, %c0_32], %57 {strides = array<i32>} : memref<5x128xf32, #tpu.memory_space<vmem>>, vector<1x128xf32>,
    return
  }
  func.func @transform_0(%arg0: i32) -> (i32, i32) {
    %c0_i32 = arith.constant 0 : i32
    %c0_i32_0 = arith.constant 0 : i32
    return %arg0, %c0_i32 : i32, i32
  }
  func.func @transform_1(%arg0: i32) -> (i32, i32) {
    %c0_i32 = arith.constant 0 : i32
    %c0_i32_0 = arith.constant 0 : i32
    %c0_i32_1 = arith.constant 0 : i32
    return %c0_i32, %c0_i32_0 : i32, i32
  }
  func.func @transform_2(%arg0: i32) -> (i32, i32) {
    %c0_i32 = arith.constant 0 : i32
    %c0_i32_0 = arith.constant 0 : i32
    %c0_i32_1 = arith.constant 0 : i32
    return %c0_i32, %c0_i32_0 : i32, i32
  }
  func.func @transform_3(%arg0: i32) -> (i32, i32) {
    %c0_i32 = arith.constant 0 : i32
    %c0_i32_0 = arith.constant 0 : i32
    %c0_i32_1 = arith.constant 0 : i32
    return %c0_i32, %c0_i32_0 : i32, i32
  }
  func.func @transform_4(%arg0: i32) -> (i32, i32) {
    %c0_i32 = arith.constant 0 : i32
    %c0_i32_0 = arith.constant 0 : i32
    %c0_i32_1 = arith.constant 0 : i32
    return %c0_i32, %c0_i32_0 : i32, i32
  }
  func.func @transform_5(%arg0: i32) -> (i32, i32) {
    %c0_i32 = arith.constant 0 : i32
    %c0_i32_0 = arith.constant 0 : i32
    %c0_i32_1 = arith.constant 0 : i32
    return %c0_i32, %c0_i32_0 : i32, i32
  }
  func.func @transform_6(%arg0: i32) -> (i32, i32) {
    %c0_i32 = arith.constant 0 : i32
    %c0_i32_0 = arith.constant 0 : i32
    %c0_i32_1 = arith.constant 0 : i32
    return %c0_i32, %c0_i32_0 : i32, i32
  }
  func.func @transform_7(%arg0: i32) -> (i32, i32) {
    %c0_i32 = arith.constant 0 : i32
    %c0_i32_0 = arith.constant 0 : i32
    return %c0_i32, %arg0 : i32, i32
  }
  func.func @transform_8(%arg0: i32) -> (i32, i32) {
    %c0_i32 = arith.constant 0 : i32
    %c0_i32_0 = arith.constant 0 : i32
    return %c0_i32, %arg0 : i32, i32
  }
}

</mosaic_0001>

<llo_original>
// kernel: actor_forward.1
$region0: #{actor_forward.1}
  #allocation0 [shape = 'u32[]', space=smem, size = 0x4, offset = 0x4, fixed_abs, tag = 'smem constant byte address 0x4 - core index']
  #allocation1 [shape = 'u32[144,128]{1,0:T(1,128)}', space=vmem, size = 0x12000, scoped, tag = 'internal scratch']
  %s0 = inlined_call_operand.vmem [shape: f32[128,16], index: 0, kind: input, shape index: {}]
  %s1 = inlined_call_operand.vmem [shape: f32[16,128], index: 1, kind: input, shape index: {}]
  %s2 = inlined_call_operand.vmem [shape: f32[1,128], index: 2, kind: input, shape index: {}]
  %s3 = inlined_call_operand.vmem [shape: f32[128,128], index: 3, kind: input, shape index: {}]
  %s4 = inlined_call_operand.vmem [shape: f32[1,128], index: 4, kind: input, shape index: {}]
  %s5 = inlined_call_operand.vmem [shape: f32[8,128], index: 5, kind: input, shape index: {}]
  %s6 = inlined_call_operand.vmem [shape: f32[8,1], index: 6, kind: input, shape index: {}]
  %s7 = inlined_call_operand.vmem [shape: f32[4,128], index: 7, kind: input, shape index: {}]
  %s8 = inlined_call_operand.vmem [shape: f32[5,128], index: 8, kind: output, shape index: {}]
  %s9 = sld [smem:[#allocation0]]
  $region42: #{actor_forward.1} parent=0
    _
  %s11 = ssub.s32 1, %s9
  %s12 = scalar_select 0, %s11, %s9
  // Predicated region
  $region2: #{actor_forward.1} parent=0 // pred_check
    _
  $region3: #{actor_forward.1} parent=0 // pred_check_branch
    %14 = sbr.rel (0) target = $region5
  $region4: #{actor_forward.1} parent=0 // pred_region
    _
  $region5: #{actor_forward.1} parent=0 // pred_fallthru
    _
  // Predicated region
  $region6: #{actor_forward.1} parent=0 // pred_check
    _
  $region7: #{actor_forward.1} parent=0 // pred_check_branch
    %16 = sbr.rel (0) target = $region9
  $region8: #{actor_forward.1} parent=0 // pred_region
    _
  $region9: #{actor_forward.1} parent=0 // pred_fallthru
    _
  // Predicated region
  $region10: #{actor_forward.1} parent=0 // pred_check
    _
  $region11: #{actor_forward.1} parent=0 // pred_check_branch
    %18 = sbr.rel (0) target = $region13
  $region12: #{actor_forward.1} parent=0 // pred_region
    _
  $region13: #{actor_forward.1} parent=0 // pred_fallthru
    _
  // Predicated region
  $region14: #{actor_forward.1} parent=0 // pred_check
    _
  $region15: #{actor_forward.1} parent=0 // pred_check_branch
    %20 = sbr.rel (0) target = $region17
  $region16: #{actor_forward.1} parent=0 // pred_region
    _
  $region17: #{actor_forward.1} parent=0 // pred_fallthru
    _
  // Predicated region
  $region18: #{actor_forward.1} parent=0 // pred_check
    _
  $region19: #{actor_forward.1} parent=0 // pred_check_branch
    %22 = sbr.rel (0) target = $region21
  $region20: #{actor_forward.1} parent=0 // pred_region
    _
  $region21: #{actor_forward.1} parent=0 // pred_fallthru
    _
  // Predicated region
  $region22: #{actor_forward.1} parent=0 // pred_check
    _
  $region23: #{actor_forward.1} parent=0 // pred_check_branch
    %24 = sbr.rel (0) target = $region25
  $region24: #{actor_forward.1} parent=0 // pred_region
    _
  $region25: #{actor_forward.1} parent=0 // pred_fallthru
    _
  // Predicated region
  $region26: #{actor_forward.1} parent=0 // pred_check
    _
  $region27: #{actor_forward.1} parent=0 // pred_check_branch
    %26 = sbr.rel (0) target = $region29
  $region28: #{actor_forward.1} parent=0 // pred_region
    _
  $region29: #{actor_forward.1} parent=0 // pred_fallthru
    _
  // Predicated region
  $region30: #{actor_forward.1} parent=0 // pred_check
    _
  $region31: #{actor_forward.1} parent=0 // pred_check_branch
    %28 = sbr.rel (0) target = $region33
  $region32: #{actor_forward.1} parent=0 // pred_region
    _
  $region33: #{actor_forward.1} parent=0 // pred_fallthru
    _
  %v29 = vld [vmem:[%s0] sm:$0xff]
  %v30 = vld [vmem:[%s0 + $0x8] sm:$0xff]
  %v31 = vld [vmem:[%s0 + $0x10] sm:$0xff]
  %v32 = vld [vmem:[%s0 + $0x18] sm:$0xff]
  %v33 = vld [vmem:[%s0 + $0x20] sm:$0xff]
  %v34 = vld [vmem:[%s0 + $0x28] sm:$0xff]
  %v35 = vld [vmem:[%s0 + $0x30] sm:$0xff]
  %v36 = vld [vmem:[%s0 + $0x38] sm:$0xff]
  %v37 = vld [vmem:[%s0 + $0x40] sm:$0xff]
  %v38 = vld [vmem:[%s0 + $0x48] sm:$0xff]
  %v39 = vld [vmem:[%s0 + $0x50] sm:$0xff]
  %v40 = vld [vmem:[%s0 + $0x58] sm:$0xff]
  %v41 = vld [vmem:[%s0 + $0x60] sm:$0xff]
  %v42 = vld [vmem:[%s0 + $0x68] sm:$0xff]
  %v43 = vld [vmem:[%s0 + $0x70] sm:$0xff]
  %v44 = vld [vmem:[%s0 + $0x78] sm:$0xff]
  %v45 = vld [vmem:[%s1] sm:$0xff]
  %v46 = vld [vmem:[%s1 + $0x8] sm:$0xff]
  %v47 = vld [vmem:[%s2] sm:$0x1]
  %v49 = vlaneseq
  %v50 = vshrl.u32 %v49, 7
  %v51 = vsub.s32 0, %v50
  %v52 = vrot.slane %v47, %v51
  %vm54 = vcmask 130048
  %v56 = vsel %vm54, %v29, 0
  %v59 = vsel %vm54, %v30, 0
  %v62 = vsel %vm54, %v31, 0
  %v65 = vsel %vm54, %v32, 0
  %v68 = vsel %vm54, %v33, 0
  %v71 = vsel %vm54, %v34, 0
  %v74 = vsel %vm54, %v35, 0
  %v77 = vsel %vm54, %v36, 0
  %v80 = vsel %vm54, %v37, 0
  %v83 = vsel %vm54, %v38, 0
  %v86 = vsel %vm54, %v39, 0
  %v89 = vsel %vm54, %v40, 0
  %v92 = vsel %vm54, %v41, 0
  %v95 = vsel %vm54, %v42, 0
  %v98 = vsel %vm54, %v43, 0
  %v101 = vsel %vm54, %v44, 0
  %103 = vmatprep.subr.mxu0 0.0
  %104 = vmatpush1.msra.mxu0 0.0
  %105 = vmatprep.subr.mxu0 0.0
  %106 = vmatpush1.msra.mxu0 0.0
  %107 = vmatprep.subr.mxu0 0.0
  %108 = vmatpush1.msra.mxu0 0.0
  %109 = vmatprep.subr.mxu0 0.0
  %110 = vmatpush1.msra.mxu0 0.0
  %111 = vmatprep.subr.mxu0 0.0
  %112 = vmatpush1.msra.mxu0 0.0
  %113 = vmatprep.subr.mxu0 0.0
  %114 = vmatpush1.msra.mxu0 0.0
  %115 = vmatprep.subr.mxu0 0.0
  %116 = vmatpush1.msra.mxu0 0.0
  %117 = vmatprep.subr.mxu0 0.0
  %118 = vmatpush1.msra.mxu0 0.0
  %119 = vmatprep.subr.mxu0 0.0
  %120 = vmatpush1.msra.mxu0 0.0
  %121 = vmatprep.subr.mxu0 0.0
  %122 = vmatpush1.msra.mxu0 0.0
  %123 = vmatprep.subr.mxu0 0.0
  %124 = vmatpush1.msra.mxu0 0.0
  %125 = vmatprep.subr.mxu0 0.0
  %126 = vmatpush1.msra.mxu0 0.0
  %127 = vmatprep.subr.mxu0 0.0
  %128 = vmatpush1.msra.mxu0 0.0
  %129 = vmatprep.subr.mxu0 0.0
  %130 = vmatpush1.msra.mxu0 0.0
  %131 = vmatprep.subr.mxu0 0.0
  %132 = vmatpush1.msra.mxu0 %v46
  %133 = vmatprep.subr.mxu0 0.0
  %134 = vmatpush1.msra.mxu0 %v45
  %135 = vmatprep.subr.mxu0 0.0
  %136 = vmatpush2.msra.mxu0 0.0
  %137 = vmatprep.subr.mxu0 0.0
  %138 = vmatpush2.msra.mxu0 0.0
  %139 = vmatprep.subr.mxu0 0.0
  %140 = vmatpush2.msra.mxu0 0.0
  %141 = vmatprep.subr.mxu0 0.0
  %142 = vmatpush2.msra.mxu0 0.0
  %143 = vmatprep.subr.mxu0 0.0
  %144 = vmatpush2.msra.mxu0 0.0
  %145 = vmatprep.subr.mxu0 0.0
  %146 = vmatpush2.msra.mxu0 0.0
  %147 = vmatprep.subr.mxu0 0.0
  %148 = vmatpush2.msra.mxu0 0.0
  %149 = vmatprep.subr.mxu0 0.0
  %150 = vmatpush2.msra.mxu0 0.0
  %151 = vmatprep.subr.mxu0 0.0
  %152 = vmatpush2.msra.mxu0 0.0
  %153 = vmatprep.subr.mxu0 0.0
  %154 = vmatpush2.msra.mxu0 0.0
  %155 = vmatprep.subr.mxu0 0.0
  %156 = vmatpush2.msra.mxu0 0.0
  %157 = vmatprep.subr.mxu0 0.0
  %158 = vmatpush2.msra.mxu0 0.0
  %159 = vmatprep.subr.mxu0 0.0
  %160 = vmatpush2.msra.mxu0 0.0
  %161 = vmatprep.subr.mxu0 0.0
  %162 = vmatpush2.msra.mxu0 0.0
  %163 = vmatprep.subr.mxu0 0.0
  %164 = vmatpush2.msra.mxu0 0.0
  %165 = vmatprep.subr.mxu0 0.0
  %166 = vmatpush2.msra.mxu0 0.0
  %167 = vmatprep.mubr.f32.mxu0 0.0
  %168 = vmatmul.mubr.f32.gmra.mxu0 %v56
  %v169 = vpop.f32.mrf.mxu0
  %v170 = vadd.f32 %v52, %v169
  %v171 = vpop.f32.mrf.mxu0
  %172 = vmatprep.mubr.f32.mxu0 0.0
  %173 = vmatmul.mubr.f32.gmra.mxu0 %v59
  %v174 = vpop.f32.mrf.mxu0
  %v175 = vadd.f32 %v52, %v174
  %v176 = vpop.f32.mrf.mxu0
  %177 = vmatprep.mubr.f32.mxu0 0.0
  %178 = vmatmul.mubr.f32.gmra.mxu0 %v62
  %v179 = vpop.f32.mrf.mxu0
  %v180 = vadd.f32 %v52, %v179
  %v181 = vpop.f32.mrf.mxu0
  %182 = vmatprep.mubr.f32.mxu0 0.0
  %183 = vmatmul.mubr.f32.gmra.mxu0 %v65
  %v184 = vpop.f32.mrf.mxu0
  %v185 = vadd.f32 %v52, %v184
  %v186 = vpop.f32.mrf.mxu0
  %187 = vmatprep.mubr.f32.mxu0 0.0
  %188 = vmatmul.mubr.f32.gmra.mxu0 %v68
  %v189 = vpop.f32.mrf.mxu0
  %v190 = vadd.f32 %v52, %v189
  %v191 = vpop.f32.mrf.mxu0
  %192 = vmatprep.mubr.f32.mxu0 0.0
  %193 = vmatmul.mubr.f32.gmra.mxu0 %v71
  %v194 = vpop.f32.mrf.mxu0
  %v195 = vadd.f32 %v52, %v194
  %v196 = vpop.f32.mrf.mxu0
  %197 = vmatprep.mubr.f32.mxu0 0.0
  %198 = vmatmul.mubr.f32.gmra.mxu0 %v74
  %v199 = vpop.f32.mrf.mxu0
  %v200 = vadd.f32 %v52, %v199
  %v201 = vpop.f32.mrf.mxu0
  %202 = vmatprep.mubr.f32.mxu0 0.0
  %203 = vmatmul.mubr.f32.gmra.mxu0 %v77
  %v204 = vpop.f32.mrf.mxu0
  %v205 = vadd.f32 %v52, %v204
  %v206 = vpop.f32.mrf.mxu0
  %207 = vmatprep.mubr.f32.mxu0 0.0
  %208 = vmatmul.mubr.f32.gmra.mxu0 %v80
  %v209 = vpop.f32.mrf.mxu0
  %v210 = vadd.f32 %v52, %v209
  %v211 = vpop.f32.mrf.mxu0
  %212 = vmatprep.mubr.f32.mxu0 0.0
  %213 = vmatmul.mubr.f32.gmra.mxu0 %v83
  %v214 = vpop.f32.mrf.mxu0
  %v215 = vadd.f32 %v52, %v214
  %v216 = vpop.f32.mrf.mxu0
  %217 = vmatprep.mubr.f32.mxu0 0.0
  %218 = vmatmul.mubr.f32.gmra.mxu0 %v86
  %v219 = vpop.f32.mrf.mxu0
  %v220 = vadd.f32 %v52, %v219
  %v221 = vpop.f32.mrf.mxu0
  %222 = vmatprep.mubr.f32.mxu0 0.0
  %223 = vmatmul.mubr.f32.gmra.mxu0 %v89
  %v224 = vpop.f32.mrf.mxu0
  %v225 = vadd.f32 %v52, %v224
  %v226 = vpop.f32.mrf.mxu0
  %227 = vmatprep.mubr.f32.mxu0 0.0
  %228 = vmatmul.mubr.f32.gmra.mxu0 %v92
  %v229 = vpop.f32.mrf.mxu0
  %v230 = vadd.f32 %v52, %v229
  %v231 = vpop.f32.mrf.mxu0
  %232 = vmatprep.mubr.f32.mxu0 0.0
  %233 = vmatmul.mubr.f32.gmra.mxu0 %v95
  %v234 = vpop.f32.mrf.mxu0
  %v235 = vadd.f32 %v52, %v234
  %v236 = vpop.f32.mrf.mxu0
  %237 = vmatprep.mubr.f32.mxu0 0.0
  %238 = vmatmul.mubr.f32.gmra.mxu0 %v98
  %v239 = vpop.f32.mrf.mxu0
  %v240 = vadd.f32 %v52, %v239
  %v241 = vpop.f32.mrf.mxu0
  %242 = vmatprep.mubr.f32.mxu0 0.0
  %243 = vmatmul.mubr.f32.gmra.mxu0 %v101
  %v244 = vpop.f32.mrf.mxu0
  %v245 = vadd.f32 %v52, %v244
  %v246 = vpop.f32.mrf.mxu0
  %247 = vdwg.mxu0
  %v248 = vmax.f32 %v170, 0.0
  %v249 = vmax.f32 %v175, 0.0
  %v250 = vmax.f32 %v180, 0.0
  %v251 = vmax.f32 %v185, 0.0
  %v252 = vmax.f32 %v190, 0.0
  %v253 = vmax.f32 %v195, 0.0
  %v254 = vmax.f32 %v200, 0.0
  %v255 = vmax.f32 %v205, 0.0
  %v256 = vmax.f32 %v210, 0.0
  %v257 = vmax.f32 %v215, 0.0
  %v258 = vmax.f32 %v220, 0.0
  %v259 = vmax.f32 %v225, 0.0
  %v260 = vmax.f32 %v230, 0.0
  %v261 = vmax.f32 %v235, 0.0
  %v262 = vmax.f32 %v240, 0.0
  %v263 = vmax.f32 %v245, 0.0
  %v264 = vld [vmem:[%s3] sm:$0xff]
  %v265 = vld [vmem:[%s3 + $0x8] sm:$0xff]
  %v266 = vld [vmem:[%s3 + $0x10] sm:$0xff]
  %v267 = vld [vmem:[%s3 + $0x18] sm:$0xff]
  %v268 = vld [vmem:[%s3 + $0x20] sm:$0xff]
  %v269 = vld [vmem:[%s3 + $0x28] sm:$0xff]
  %v270 = vld [vmem:[%s3 + $0x30] sm:$0xff]
  %v271 = vld [vmem:[%s3 + $0x38] sm:$0xff]
  %v272 = vld [vmem:[%s3 + $0x40] sm:$0xff]
  %v273 = vld [vmem:[%s3 + $0x48] sm:$0xff]
  %v274 = vld [vmem:[%s3 + $0x50] sm:$0xff]
  %v275 = vld [vmem:[%s3 + $0x58] sm:$0xff]
  %v276 = vld [vmem:[%s3 + $0x60] sm:$0xff]
  %v277 = vld [vmem:[%s3 + $0x68] sm:$0xff]
  %v278 = vld [vmem:[%s3 + $0x70] sm:$0xff]
  %v279 = vld [vmem:[%s3 + $0x78] sm:$0xff]
  %v280 = vld [vmem:[%s4] sm:$0x1]
  %v282 = vlaneseq
  %v283 = vshrl.u32 %v282, 7
  %v284 = vsub.s32 0, %v283
  %v285 = vrot.slane %v280, %v284
  %287 = vmatprep.subr.mxu0 0.0
  %288 = vmatpush1.msra.mxu0 %v279
  %289 = vmatprep.subr.mxu0 0.0
  %290 = vmatpush1.msra.mxu0 %v278
  %291 = vmatprep.subr.mxu0 0.0
  %292 = vmatpush1.msra.mxu0 %v277
  %293 = vmatprep.subr.mxu0 0.0
  %294 = vmatpush1.msra.mxu0 %v276
  %295 = vmatprep.subr.mxu0 0.0
  %296 = vmatpush1.msra.mxu0 %v275
  %297 = vmatprep.subr.mxu0 0.0
  %298 = vmatpush1.msra.mxu0 %v274
  %299 = vmatprep.subr.mxu0 0.0
  %300 = vmatpush1.msra.mxu0 %v273
  %301 = vmatprep.subr.mxu0 0.0
  %302 = vmatpush1.msra.mxu0 %v272
  %303 = vmatprep.subr.mxu0 0.0
  %304 = vmatpush1.msra.mxu0 %v271
  %305 = vmatprep.subr.mxu0 0.0
  %306 = vmatpush1.msra.mxu0 %v270
  %307 = vmatprep.subr.mxu0 0.0
  %308 = vmatpush1.msra.mxu0 %v269
  %309 = vmatprep.subr.mxu0 0.0
  %310 = vmatpush1.msra.mxu0 %v268
  %311 = vmatprep.subr.mxu0 0.0
  %312 = vmatpush1.msra.mxu0 %v267
  %313 = vmatprep.subr.mxu0 0.0
  %314 = vmatpush1.msra.mxu0 %v266
  %315 = vmatprep.subr.mxu0 0.0
  %316 = vmatpush1.msra.mxu0 %v265
  %317 = vmatprep.subr.mxu0 0.0
  %318 = vmatpush1.msra.mxu0 %v264
  %319 = vmatprep.subr.mxu0 0.0
  %320 = vmatpush2.msra.mxu0 0.0
  %321 = vmatprep.subr.mxu0 0.0
  %322 = vmatpush2.msra.mxu0 0.0
  %323 = vmatprep.subr.mxu0 0.0
  %324 = vmatpush2.msra.mxu0 0.0
  %325 = vmatprep.subr.mxu0 0.0
  %326 = vmatpush2.msra.mxu0 0.0
  %327 = vmatprep.subr.mxu0 0.0
  %328 = vmatpush2.msra.mxu0 0.0
  %329 = vmatprep.subr.mxu0 0.0
  %330 = vmatpush2.msra.mxu0 0.0
  %331 = vmatprep.subr.mxu0 0.0
  %332 = vmatpush2.msra.mxu0 0.0
  %333 = vmatprep.subr.mxu0 0.0
  %334 = vmatpush2.msra.mxu0 0.0
  %335 = vmatprep.subr.mxu0 0.0
  %336 = vmatpush2.msra.mxu0 0.0
  %337 = vmatprep.subr.mxu0 0.0
  %338 = vmatpush2.msra.mxu0 0.0
  %339 = vmatprep.subr.mxu0 0.0
  %340 = vmatpush2.msra.mxu0 0.0
  %341 = vmatprep.subr.mxu0 0.0
  %342 = vmatpush2.msra.mxu0 0.0
  %343 = vmatprep.subr.mxu0 0.0
  %344 = vmatpush2.msra.mxu0 0.0
  %345 = vmatprep.subr.mxu0 0.0
  %346 = vmatpush2.msra.mxu0 0.0
  %347 = vmatprep.subr.mxu0 0.0
  %348 = vmatpush2.msra.mxu0 0.0
  %349 = vmatprep.subr.mxu0 0.0
  %350 = vmatpush2.msra.mxu0 0.0
  %351 = vmatprep.mubr.f32.mxu0 0.0
  %352 = vmatmul.mubr.f32.gmra.mxu0 %v248
  %v353 = vpop.f32.mrf.mxu0
  %v354 = vadd.f32 %v285, %v353
  %v355 = vpop.f32.mrf.mxu0
  %356 = vmatprep.mubr.f32.mxu0 0.0
  %357 = vmatmul.mubr.f32.gmra.mxu0 %v249
  %v358 = vpop.f32.mrf.mxu0
  %v359 = vadd.f32 %v285, %v358
  %v360 = vpop.f32.mrf.mxu0
  %361 = vmatprep.mubr.f32.mxu0 0.0
  %362 = vmatmul.mubr.f32.gmra.mxu0 %v250
  %v363 = vpop.f32.mrf.mxu0
  %v364 = vadd.f32 %v285, %v363
  %v365 = vpop.f32.mrf.mxu0
  %366 = vmatprep.mubr.f32.mxu0 0.0
  %367 = vmatmul.mubr.f32.gmra.mxu0 %v251
  %v368 = vpop.f32.mrf.mxu0
  %v369 = vadd.f32 %v285, %v368
  %v370 = vpop.f32.mrf.mxu0
  %371 = vmatprep.mubr.f32.mxu0 0.0
  %372 = vmatmul.mubr.f32.gmra.mxu0 %v252
  %v373 = vpop.f32.mrf.mxu0
  %v374 = vadd.f32 %v285, %v373
  %v375 = vpop.f32.mrf.mxu0
  %376 = vmatprep.mubr.f32.mxu0 0.0
  %377 = vmatmul.mubr.f32.gmra.mxu0 %v253
  %v378 = vpop.f32.mrf.mxu0
  %v379 = vadd.f32 %v285, %v378
  %v380 = vpop.f32.mrf.mxu0
  %381 = vmatprep.mubr.f32.mxu0 0.0
  %382 = vmatmul.mubr.f32.gmra.mxu0 %v254
  %v383 = vpop.f32.mrf.mxu0
  %v384 = vadd.f32 %v285, %v383
  %v385 = vpop.f32.mrf.mxu0
  %386 = vmatprep.mubr.f32.mxu0 0.0
  %387 = vmatmul.mubr.f32.gmra.mxu0 %v255
  %v388 = vpop.f32.mrf.mxu0
  %v389 = vadd.f32 %v285, %v388
  %v390 = vpop.f32.mrf.mxu0
  %391 = vmatprep.mubr.f32.mxu0 0.0
  %392 = vmatmul.mubr.f32.gmra.mxu0 %v256
  %v393 = vpop.f32.mrf.mxu0
  %v394 = vadd.f32 %v285, %v393
  %v395 = vpop.f32.mrf.mxu0
  %396 = vmatprep.mubr.f32.mxu0 0.0
  %397 = vmatmul.mubr.f32.gmra.mxu0 %v257
  %v398 = vpop.f32.mrf.mxu0
  %v399 = vadd.f32 %v285, %v398
  %v400 = vpop.f32.mrf.mxu0
  %401 = vmatprep.mubr.f32.mxu0 0.0
  %402 = vmatmul.mubr.f32.gmra.mxu0 %v258
  %v403 = vpop.f32.mrf.mxu0
  %v404 = vadd.f32 %v285, %v403
  %v405 = vpop.f32.mrf.mxu0
  %406 = vmatprep.mubr.f32.mxu0 0.0
  %407 = vmatmul.mubr.f32.gmra.mxu0 %v259
  %v408 = vpop.f32.mrf.mxu0
  %v409 = vadd.f32 %v285, %v408
  %v410 = vpop.f32.mrf.mxu0
  %411 = vmatprep.mubr.f32.mxu0 0.0
  %412 = vmatmul.mubr.f32.gmra.mxu0 %v260
  %v413 = vpop.f32.mrf.mxu0
  %v414 = vadd.f32 %v285, %v413
  %v415 = vpop.f32.mrf.mxu0
  %416 = vmatprep.mubr.f32.mxu0 0.0
  %417 = vmatmul.mubr.f32.gmra.mxu0 %v261
  %v418 = vpop.f32.mrf.mxu0
  %v419 = vadd.f32 %v285, %v418
  %v420 = vpop.f32.mrf.mxu0
  %421 = vmatprep.mubr.f32.mxu0 0.0
  %422 = vmatmul.mubr.f32.gmra.mxu0 %v262
  %v423 = vpop.f32.mrf.mxu0
  %v424 = vadd.f32 %v285, %v423
  %v425 = vpop.f32.mrf.mxu0
  %426 = vmatprep.mubr.f32.mxu0 0.0
  %427 = vmatmul.mubr.f32.gmra.mxu0 %v263
  %v428 = vpop.f32.mrf.mxu0
  %v429 = vadd.f32 %v285, %v428
  %v430 = vpop.f32.mrf.mxu0
  %431 = vdwg.mxu0
  %v432 = vmax.f32 %v354, 0.0
  %v433 = vmax.f32 %v359, 0.0
  %v434 = vmax.f32 %v364, 0.0
  %v435 = vmax.f32 %v369, 0.0
  %v436 = vmax.f32 %v374, 0.0
  %v437 = vmax.f32 %v379, 0.0
  %v438 = vmax.f32 %v384, 0.0
  %v439 = vmax.f32 %v389, 0.0
  %v440 = vmax.f32 %v394, 0.0
  %v441 = vmax.f32 %v399, 0.0
  %v442 = vmax.f32 %v404, 0.0
  %v443 = vmax.f32 %v409, 0.0
  %v444 = vmax.f32 %v414, 0.0
  %v445 = vmax.f32 %v419, 0.0
  %v446 = vmax.f32 %v424, 0.0
  %v447 = vmax.f32 %v429, 0.0
  %v448 = vld [vmem:[%s5] sm:$0xff]
  %v449 = vld [vmem:[%s6] sm:$0xff]
  %451 = vset.pattern.permute.xlu0 0
  %452 = vperm.xlu0 %451, %v449
  %v453 = vpop.permute.xlu0 %452
  %455 = vmatprep.subr.mxu0 0.0
  %456 = vmatpush1.xpose.msra.mxu0 %v447
  %457 = vmatprep.subr.mxu0 0.0
  %458 = vmatpush1.xpose.msra.mxu0 %v446
  %459 = vmatprep.subr.mxu0 0.0
  %460 = vmatpush1.xpose.msra.mxu0 %v445
  %461 = vmatprep.subr.mxu0 0.0
  %462 = vmatpush1.xpose.msra.mxu0 %v444
  %463 = vmatprep.subr.mxu0 0.0
  %464 = vmatpush1.xpose.msra.mxu0 %v443
  %465 = vmatprep.subr.mxu0 0.0
  %466 = vmatpush1.xpose.msra.mxu0 %v442
  %467 = vmatprep.subr.mxu0 0.0
  %468 = vmatpush1.xpose.msra.mxu0 %v441
  %469 = vmatprep.subr.mxu0 0.0
  %470 = vmatpush1.xpose.msra.mxu0 %v440
  %471 = vmatprep.subr.mxu0 0.0
  %472 = vmatpush1.xpose.msra.mxu0 %v439
  %473 = vmatprep.subr.mxu0 0.0
  %474 = vmatpush1.xpose.msra.mxu0 %v438
  %475 = vmatprep.subr.mxu0 0.0
  %476 = vmatpush1.xpose.msra.mxu0 %v437
  %477 = vmatprep.subr.mxu0 0.0
  %478 = vmatpush1.xpose.msra.mxu0 %v436
  %479 = vmatprep.subr.mxu0 0.0
  %480 = vmatpush1.xpose.msra.mxu0 %v435
  %481 = vmatprep.subr.mxu0 0.0
  %482 = vmatpush1.xpose.msra.mxu0 %v434
  %483 = vmatprep.subr.mxu0 0.0
  %484 = vmatpush1.xpose.msra.mxu0 %v433
  %485 = vmatprep.subr.mxu0 0.0
  %486 = vmatpush1.xpose.msra.mxu0 %v432
  %487 = vmatprep.subr.mxu0 0.0
  %488 = vmatpush2.xpose.msra.mxu0 0.0
  %489 = vmatprep.subr.mxu0 0.0
  %490 = vmatpush2.xpose.msra.mxu0 0.0
  %491 = vmatprep.subr.mxu0 0.0
  %492 = vmatpush2.xpose.msra.mxu0 0.0
  %493 = vmatprep.subr.mxu0 0.0
  %494 = vmatpush2.xpose.msra.mxu0 0.0
  %495 = vmatprep.subr.mxu0 0.0
  %496 = vmatpush2.xpose.msra.mxu0 0.0
  %497 = vmatprep.subr.mxu0 0.0
  %498 = vmatpush2.xpose.msra.mxu0 0.0
  %499 = vmatprep.subr.mxu0 0.0
  %500 = vmatpush2.xpose.msra.mxu0 0.0
  %501 = vmatprep.subr.mxu0 0.0
  %502 = vmatpush2.xpose.msra.mxu0 0.0
  %503 = vmatprep.subr.mxu0 0.0
  %504 = vmatpush2.xpose.msra.mxu0 0.0
  %505 = vmatprep.subr.mxu0 0.0
  %506 = vmatpush2.xpose.msra.mxu0 0.0
  %507 = vmatprep.subr.mxu0 0.0
  %508 = vmatpush2.xpose.msra.mxu0 0.0
  %509 = vmatprep.subr.mxu0 0.0
  %510 = vmatpush2.xpose.msra.mxu0 0.0
  %511 = vmatprep.subr.mxu0 0.0
  %512 = vmatpush2.xpose.msra.mxu0 0.0
  %513 = vmatprep.subr.mxu0 0.0
  %514 = vmatpush2.xpose.msra.mxu0 0.0
  %515 = vmatprep.subr.mxu0 0.0
  %516 = vmatpush2.xpose.msra.mxu0 0.0
  %517 = vmatprep.subr.mxu0 0.0
  %518 = vmatpush2.xpose.msra.mxu0 0.0
  %519 = vmatprep.mubr.f32.mxu0 0.0
  %520 = vmatmul.mubr.f32.gmra.mxu0 %v448
  %v521 = vpop.f32.mrf.mxu0
  %v522 = vadd.f32 %v453, %v521
  %v523 = vpop.f32.mrf.mxu0
  %524 = vdwg.mxu0
  %v525 = vtanh.pop %v522
  %v526 = vadd.f32 %v525, 1.0
  %v527 = vmul.f32 %v526, 11.0
  %v528 = vadd.f32 %v527, -20.0
  %v529 = vmul.f32 %v528, 1.442695
  %v530 = vpow.pop %v529
  %v531 = vld [vmem:[%s7] sm:$0xf]
  %v533 = vrot.slane %v531, 4
  %v535 = vmul.f32 %v530, %v533
  %v537 = vrot.slane %v535, 4
  %v539 = vadd.f32 %v525, %v537
  %v540 = vtanh.pop %v539
  %v541 = vmul.f32 %v531, -0.5
  %v542 = vmul.f32 %v541, %v531
  %v544 = vrot.slane %v528, 4
  %v546 = vsub.f32 %v542, %v544
  %v547 = vsub.f32 %v546, 0.9189385
  %v548 = vmul.f32 %v539, -2.0
  %v549 = vmax.f32 %v548, 0.0
  %v550 = vand.u32 2147483647, %v548
  %v551 = vsub.f32 0.0, %v550
  %v552 = vmul.f32 %v551, 1.442695
  %v553 = vpow.pop %v552
  %v554 = vadd.f32 %v553, 1.0
  %v555 = vlog2.pop %v554
  %v556 = vmul.f32 %v555, 0.6931472
  %v557 = vmul.f32 -0.5, %v553
  %v558 = vadd.f32 %v557, 1.0
  %v559 = vmul.f32 %v558, %v553
  %v560 = vand.u32 2147483647, %v553
  %vm561 = vcmp.lt.f32.partialorder %v560, 0.0004427343
  %v562 = vsel %vm561, %v559, %v556
  %v563 = vadd.f32 %v549, %v562
  %v564 = vsub.f32 0.6931472, %v539
  %v565 = vsub.f32 %v564, %v563
  %v566 = vmul.f32 %v565, 2.0
  %v567 = vsub.f32 %v547, %v566
  %vm568 = vcmask 1043456
  %v569 = vsel %vm568, %v567, 0.0
  %v570 = vrot.slane %v569, 4
  %v571 = vadd.f32 %v569, %v570
  %v572 = vrot.slane %v571, 2
  %v573 = vadd.f32 %v571, %v572
  %v574 = vrot.slane %v573, 1
  %v575 = vadd.f32 %v573, %v574
  %576 = vst [vmem:[%s8] sm:$0xf] %v540
  %577 = vst [vmem:[%s8 + $0x4] sm:$0x1] %v575
  // Predicated region
  $region34: #{actor_forward.1} parent=0 // pred_check
    _
  $region35: #{actor_forward.1} parent=0 // pred_check_branch
    %579 = sbr.rel (0) target = $region37
  $region36: #{actor_forward.1} parent=0 // pred_region
    _
  $region37: #{actor_forward.1} parent=0 // pred_fallthru
    _
  // Predicated region
  $region38: #{actor_forward.1} parent=0 // pred_check
    _
  $region39: #{actor_forward.1} parent=0 // pred_check_branch
    %581 = sbr.rel (0) target = $region41
  $region40: #{actor_forward.1} parent=0 // pred_region
    _
  $region41: #{actor_forward.1} parent=0 // pred_fallthru
    _

</llo_original>
